<compile_context>
chip_gen: v7x
topology: tpu7x:2x2x1
jax: 0.10.0
libtpu: 0.0.40
codegen_flags: <defaults>
</compile_context>

<pallas_src>
import jax
import jax.numpy as jnp
from jax.experimental import pallas as pl
from jax.experimental.pallas import tpu as pltpu


def _seq_attention_kernel(x_ref, w1_ref, b1_ref, w2_ref, b2_ref, out_ref):
    # x_ref:  (TB, L, D_in)   block of batch elements
    # w1_ref: (D_in, D_hid)
    # b1_ref: (1, D_hid)
    # w2_ref: (D_hid, H)
    # b2_ref: (1, H)
    # out_ref:(TB, D_in)
    TB, L, D_in = x_ref.shape
    x = x_ref[...]                                     # (TB, L, D_in)
    x_f32 = x.astype(jnp.float32)
    x2d = x_f32.reshape(TB * L, D_in)                  # batch*seq rows for the MXU

    # first_linear + tanh  -> one big (TB*L, D_in) x (D_in, D_hid) MXU matmul
    h = jnp.tanh(
        jnp.dot(x2d, w1_ref[...], preferred_element_type=jnp.float32)
        + b1_ref[...]                                  # (1, D_hid) broadcasts
    )                                                  # (TB*L, D_hid)

    # second_linear -> (TB*L, H)
    s = jnp.dot(h, w2_ref[...], preferred_element_type=jnp.float32) + b2_ref[...]
    H = s.shape[-1]
    s = s.reshape(TB, L, H)                            # restore batch structure

    # softmax over the sequence axis (PyTorch softmax(axis=1))
    s_max = jnp.max(s, axis=1, keepdims=True)          # (TB, 1, H)
    e = jnp.exp(s - s_max)                             # (TB, L, H)
    denom = jnp.sum(e, axis=1, keepdims=True)          # (TB, 1, H)
    att = e * pl.reciprocal(denom, approx=True)        # (TB, L, H)

    # mean-over-heads of (att^T @ x) == (att.sum(heads)/H)-weighted sum over L
    w = jnp.sum(att, axis=-1) * (1.0 / H)              # (TB, L)
    out = jnp.sum(w[..., None] * x_f32, axis=1)        # (TB, D_in)
    out_ref[...] = out.astype(out_ref.dtype)


def _round_up(a, m):
    return ((a + m - 1) // m) * m


def drugvqa_seq_attention(x, w1, b1, w2, b2, *, block_b=None):
    """x: (B, L, D_in); w1: (D_in, D_hid); b1: (D_hid,); w2: (D_hid, H); b2: (H,).

    Weights are stored pre-transposed relative to torch.nn.Linear
    ((in, out) instead of (out, in)) so the kernel does x @ W directly.
    """
    B, L, D_in = x.shape
    D_hid = w1.shape[1]
    H = w2.shape[1]

    # Batch tile: multiple of 8 for sublane-dense output stores; capped so the
    # (TB, L, D_in) input block plus intermediates stay well within VMEM on
    # every generation (v5e/v6e/v7x).
    if block_b is None:
        block_b = min(_round_up(B, 8), 128)
    block_b = _round_up(block_b, 8)
    B_pad = _round_up(B, block_b)
    if B_pad != B:
        # Zero padding is safe: padded rows yield a uniform softmax and a zero
        # output row, which is sliced off below.
        x = jnp.pad(x, ((0, B_pad - B), (0, 0), (0, 0)))

    b1_2d = b1.reshape(1, D_hid)
    b2_2d = b2.reshape(1, H)

    out = pl.pallas_call(
        _seq_attention_kernel,
        out_shape=jax.ShapeDtypeStruct((B_pad, D_in), x.dtype),
        grid_spec=pltpu.PrefetchScalarGridSpec(
            num_scalar_prefetch=0,
            grid=(B_pad // block_b,),
            in_specs=[
                pl.BlockSpec((block_b, L, D_in), lambda b: (b, 0, 0)),
                # Constant index maps: weights/biases DMA'd once, stay resident.
                pl.BlockSpec((D_in, D_hid), lambda b: (0, 0)),
                pl.BlockSpec((1, D_hid), lambda b: (0, 0)),
                pl.BlockSpec((D_hid, H), lambda b: (0, 0)),
                pl.BlockSpec((1, H), lambda b: (0, 0)),
            ],
            out_specs=pl.BlockSpec((block_b, D_in), lambda b: (b, 0)),
        ),
        compiler_params=pltpu.CompilerParams(
            dimension_semantics=("parallel",),
        ),
    )(x, w1, b1_2d, w2, b2_2d)
    return out[:B]


def reference(x, w1, b1, w2, b2):
    """Pure-JAX reference mirroring the PyTorch forward exactly."""
    att = jnp.tanh(x @ w1 + b1)                # (B, L, D_hid)
    att = att @ w2 + b2                        # (B, L, H)
    att = jax.nn.softmax(att, axis=1)          # softmax over seq
    att = jnp.swapaxes(att, 1, 2)              # (B, H, L)
    embed = att @ x                            # (B, H, D_in)
    num_heads = w2.shape[1]
    return jnp.sum(embed, axis=1) / num_heads  # (B, D_in)


if __name__ == "__main__":
    # Small shapes consistent with the module: batch=2, seq=16, dim_input=32,
    # dim_hidden=32, num_heads=4.
    B, L, D_in, D_hid, H = 2, 16, 32, 32, 4

    key = jax.random.PRNGKey(0)
    k_x, k_w1, k_b1, k_w2, k_b2 = jax.random.split(key, 5)

    x = jax.random.normal(k_x, (B, L, D_in), dtype=jnp.float32)

    # Deterministic parameter init (PyTorch-Linear-style uniform bounds),
    # stored pre-transposed: w1 (D_in, D_hid), w2 (D_hid, H).
    bound1 = 1.0 / (D_in ** 0.5)
    w1 = jax.random.uniform(k_w1, (D_in, D_hid), minval=-bound1, maxval=bound1, dtype=jnp.float32)
    b1 = jax.random.uniform(k_b1, (D_hid,), minval=-bound1, maxval=bound1, dtype=jnp.float32)
    bound2 = 1.0 / (D_hid ** 0.5)
    w2 = jax.random.uniform(k_w2, (D_hid, H), minval=-bound2, maxval=bound2, dtype=jnp.float32)
    b2 = jax.random.uniform(k_b2, (H,), minval=-bound2, maxval=bound2, dtype=jnp.float32)

    out = drugvqa_seq_attention(x, w1, b1, w2, b2)
    out = jax.block_until_ready(out)

    ref = jax.block_until_ready(reference(x, w1, b1, w2, b2))
    assert out.shape == (B, D_in), out.shape
    # Tolerance loosened slightly for the approximate (EUP) softmax reciprocal.
    assert jnp.allclose(out, ref, atol=2e-3, rtol=2e-3), "mismatch vs reference"

    print("KERNEL_OK")
</pallas_src>

<mosaic_0001>
module attributes {stable_mosaic.version = 11 : i64} {
  func.func @_seq_attention_kernel(%arg0: i32, %arg1: memref<8x16x32xf32, #tpu.memory_space<vmem>>, %arg2: memref<32x32xf32, #tpu.memory_space<vmem>>, %arg3: memref<1x32xf32, #tpu.memory_space<vmem>>, %arg4: memref<32x4xf32, #tpu.memory_space<vmem>>, %arg5: memref<1x4xf32, #tpu.memory_space<vmem>>, %arg6: memref<8x32xf32, #tpu.memory_space<vmem>>) attributes {dimension_semantics = [#tpu.dimension_semantics<parallel>], iteration_bounds = array<i64: 1>, scalar_prefetch = 0 : i64, scratch_operands = 0 : i64, tpu.core_type = #tpu.core_type<tc>, window_params = [{transform_indices = @transform_0, window_bounds = array<i64: 8, 16, 32>}, {pipeline_mode = #tpu.pipeline_mode<synchronous>, transform_indices = @transform_1, window_bounds = array<i64: 32, 32>}, {pipeline_mode = #tpu.pipeline_mode<synchronous>, transform_indices = @transform_2, window_bounds = array<i64: 1, 32>}, {pipeline_mode = #tpu.pipeline_mode<synchronous>, transform_indices = @transform_3, window_bounds = array<i64: 32, 4>}, {pipeline_mode = #tpu.pipeline_mode<synchronous>, transform_indices = @transform_4, window_bounds = array<i64: 1, 4>}, {transform_indices = @transform_5, window_bounds = array<i64: 8, 32>}]} {
    %c0 = arith.constant 0 : index
    %c0_0 = arith.constant 0 : index
    %c0_1 = arith.constant 0 : index
    %0 = vector.load %arg1[%c0, %c0_0, %c0_1] : memref<8x16x32xf32, #tpu.memory_space<vmem>>, vector<8x16x32xf32>
    %1 = vector.shape_cast %0 : vector<8x16x32xf32> to vector<128x32xf32>
    %c0_2 = arith.constant 0 : index
    %c0_3 = arith.constant 0 : index
    %2 = vector.load %arg2[%c0_2, %c0_3] : memref<32x32xf32, #tpu.memory_space<vmem>>, vector<32x32xf32>
    %cst = arith.constant dense<0.000000e+00> : vector<128x32xf32>
    %3 = tpu.matmul %1, %2, %cst {dimension_numbers = #tpu.dot_dimension_numbers<[1], [0], [0], [1], [0, 0, 1, 1], [], []>} : vector<128x32xf32>, vector<32x32xf32>, vector<128x32xf32> -> vector<128x32xf32>
    %c0_4 = arith.constant 0 : index
    %c0_5 = arith.constant 0 : index
    %4 = vector.load %arg3[%c0_4, %c0_5] : memref<1x32xf32, #tpu.memory_space<vmem>>, vector<1x32xf32>
    %5 = vector.broadcast %4 : vector<1x32xf32> to vector<128x32xf32>
    %6 = arith.addf %3, %5 : vector<128x32xf32>
    %7 = math.tanh %6 : vector<128x32xf32>
    %c0_6 = arith.constant 0 : index
    %c0_7 = arith.constant 0 : index
    %8 = vector.load %arg4[%c0_6, %c0_7] : memref<32x4xf32, #tpu.memory_space<vmem>>, vector<32x4xf32>
    %cst_8 = arith.constant dense<0.000000e+00> : vector<128x4xf32>
    %9 = tpu.matmul %7, %8, %cst_8 {dimension_numbers = #tpu.dot_dimension_numbers<[1], [0], [0], [1], [0, 0, 1, 1], [], []>} : vector<128x32xf32>, vector<32x4xf32>, vector<128x4xf32> -> vector<128x4xf32>
    %c0_9 = arith.constant 0 : index
    %c0_10 = arith.constant 0 : index
    %10 = vector.load %arg5[%c0_9, %c0_10] : memref<1x4xf32, #tpu.memory_space<vmem>>, vector<1x4xf32>
    %11 = vector.broadcast %10 : vector<1x4xf32> to vector<128x4xf32>
    %12 = arith.addf %9, %11 : vector<128x4xf32>
    %13 = vector.shape_cast %12 : vector<128x4xf32> to vector<8x16x4xf32>
    %cst_11 = arith.constant dense<0xFF800000> : vector<8x4xf32>
    %14 = vector.multi_reduction <maximumf>, %13, %cst_11 [1] : vector<8x16x4xf32> to vector<8x4xf32>
    %15 = vector.shape_cast %14 : vector<8x4xf32> to vector<8x1x4xf32>
    %16 = vector.broadcast %15 : vector<8x1x4xf32> to vector<8x16x4xf32>
    %17 = arith.subf %13, %16 : vector<8x16x4xf32>
    %18 = math.exp %17 : vector<8x16x4xf32>
    %cst_12 = arith.constant dense<0.000000e+00> : vector<8x4xf32>
    %19 = vector.multi_reduction <add>, %18, %cst_12 [1] : vector<8x16x4xf32> to vector<8x4xf32>
    %20 = vector.shape_cast %19 : vector<8x4xf32> to vector<8x1x4xf32>
    %21 = tpu.reciprocal %20 {approx = true} : vector<8x1x4xf32> -> vector<8x1x4xf32>
    %22 = vector.broadcast %21 : vector<8x1x4xf32> to vector<8x16x4xf32>
    %23 = arith.mulf %18, %22 : vector<8x16x4xf32>
    %cst_13 = arith.constant dense<0.000000e+00> : vector<8x16xf32>
    %24 = vector.multi_reduction <add>, %23, %cst_13 [2] : vector<8x16x4xf32> to vector<8x16xf32>
    %cst_14 = arith.constant 2.500000e-01 : f32
    %25 = vector.broadcast %cst_14 : f32 to vector<8x16xf32>
    %26 = arith.mulf %24, %25 : vector<8x16xf32>
    %27 = vector.shape_cast %26 : vector<8x16xf32> to vector<8x16x1xf32>
    %28 = vector.broadcast %27 : vector<8x16x1xf32> to vector<8x16x32xf32>
    %29 = arith.mulf %28, %0 : vector<8x16x32xf32>
    %cst_15 = arith.constant dense<0.000000e+00> : vector<8x32xf32>
    %30 = vector.multi_reduction <add>, %29, %cst_15 [1] : vector<8x16x32xf32> to vector<8x32xf32>
    %c0_16 = arith.constant 0 : index
    %c0_17 = arith.constant 0 : index
    %31 = vector.load %arg6[%c0_16, %c0_17] : memref<8x32xf32, #tpu.memory_space<vmem>>, vector<8x32xf32>
    tpu.vector_store %arg6[%c0_16, %c0_17], %30 {strides = array<i32>} : memref<8x32xf32, #tpu.memory_space<vmem>>, vector<8x32xf32>,
    return
  }
  func.func @transform_0(%arg0: i32) -> (i32, i32, i32) {
    %c0_i32 = arith.constant 0 : i32
    %c0_i32_0 = arith.constant 0 : i32
    %c0_i32_1 = arith.constant 0 : i32
    return %arg0, %c0_i32, %c0_i32_0 : i32, i32, i32
  }
  func.func @transform_1(%arg0: i32) -> (i32, i32) {
    %c0_i32 = arith.constant 0 : i32
    %c0_i32_0 = arith.constant 0 : i32
    %c0_i32_1 = arith.constant 0 : i32
    return %c0_i32, %c0_i32_0 : i32, i32
  }
  func.func @transform_2(%arg0: i32) -> (i32, i32) {
    %c0_i32 = arith.constant 0 : i32
    %c0_i32_0 = arith.constant 0 : i32
    %c0_i32_1 = arith.constant 0 : i32
    return %c0_i32, %c0_i32_0 : i32, i32
  }
  func.func @transform_3(%arg0: i32) -> (i32, i32) {
    %c0_i32 = arith.constant 0 : i32
    %c0_i32_0 = arith.constant 0 : i32
    %c0_i32_1 = arith.constant 0 : i32
    return %c0_i32, %c0_i32_0 : i32, i32
  }
  func.func @transform_4(%arg0: i32) -> (i32, i32) {
    %c0_i32 = arith.constant 0 : i32
    %c0_i32_0 = arith.constant 0 : i32
    %c0_i32_1 = arith.constant 0 : i32
    return %c0_i32, %c0_i32_0 : i32, i32
  }
  func.func @transform_5(%arg0: i32) -> (i32, i32) {
    %c0_i32 = arith.constant 0 : i32
    %c0_i32_0 = arith.constant 0 : i32
    return %arg0, %c0_i32 : i32, i32
  }
}

</mosaic_0001>

<llo_original>
// kernel: tpu_custom_call.1
$region0: #{tpu_custom_call.1}
  #allocation0 [shape = 'u32[]', space=smem, size = 0x4, offset = 0x4, fixed_abs, tag = 'smem constant byte address 0x4 - core index']
  #allocation1 [shape = 'u32[144,128]{1,0:T(1,128)}', space=vmem, size = 0x12000, scoped, tag = 'internal scratch']
  %s0 = inlined_call_operand.hbm [shape: f32[8,16,32], index: 0, kind: input, shape index: {}]
  %s1 = inlined_call_operand.vmem [shape: f32[32,32], index: 1, kind: input, shape index: {}]
  %s2 = inlined_call_operand.vmem [shape: f32[1,32], index: 2, kind: input, shape index: {}]
  %s3 = inlined_call_operand.vmem [shape: f32[32,4], index: 3, kind: input, shape index: {}]
  %s4 = inlined_call_operand.vmem [shape: f32[1,4], index: 4, kind: input, shape index: {}]
  %s5 = inlined_call_operand.hbm [shape: f32[8,32], index: 5, kind: output, shape index: {}]
  %s6 = sld [smem:[#allocation0]]
  $region34: #{tpu_custom_call.1} parent=0
    _
  %s8 = ssub.s32 1, %s6
  %s9 = scalar_select 0, %s8, %s6
  $region1: #{tpu_custom_call.1} parent=0
    #allocation2 [shape = 'u8[65536]{0}', space=vmem, size = 0x10000, scoped, tag = 'input window, operand 0, single buffered']
    #allocation3 [shape = 's32[1]{0}', space=sflag, size = 0x4, scoped, tag = 'scoped memory for tpu_custom_call.1']
    #allocation4 [shape = 's32[1]{0}', space=sflag, size = 0x4, scoped, tag = 'scoped memory for tpu_custom_call.1']
    #allocation5 [shape = 'u8[4096]{0}', space=vmem, size = 0x1000, scoped, tag = 'output window, operand 0, single buffered']
    %10 = vsyncpa [#allocation3], 0
    %11 = vsyncpa [#allocation4], 0
    // Predicated region
    $region2: #{tpu_custom_call.1} parent=1 // pred_check
      _
    $region3: #{tpu_custom_call.1} parent=1 // pred_check_branch
      %13 = sbr.rel (0) target = $region5
    $region4: #{tpu_custom_call.1} parent=1 // pred_region
      %s15 = ssub.s32 2048, 2048
      %16 = vsyncadd [#allocation3], %s15
      %s17 = sshll.u32 [#allocation2], 4
      %s18 = int_to_ptr.vmem [resolvable:$true] %s17
      %23 = dma.hbm_to_vmem [thread:$0]  %s0, 2048, %s18, [#allocation3], 128, 128, 8
    $region5: #{tpu_custom_call.1} parent=1 // pred_fallthru
      _
    // Predicated region
    $region6: #{tpu_custom_call.1} parent=1 // pred_check
      _
    $region7: #{tpu_custom_call.1} parent=1 // pred_check_branch
      %25 = sbr.rel (0) target = $region9
    $region8: #{tpu_custom_call.1} parent=1 // pred_region
      _
    $region9: #{tpu_custom_call.1} parent=1 // pred_fallthru
      _
    // Predicated region
    $region10: #{tpu_custom_call.1} parent=1 // pred_check
      _
    $region11: #{tpu_custom_call.1} parent=1 // pred_check_branch
      %27 = sbr.rel (0) target = $region13
    $region12: #{tpu_custom_call.1} parent=1 // pred_region
      _
    $region13: #{tpu_custom_call.1} parent=1 // pred_fallthru
      _
    // Predicated region
    $region14: #{tpu_custom_call.1} parent=1 // pred_check
      _
    $region15: #{tpu_custom_call.1} parent=1 // pred_check_branch
      %29 = sbr.rel (0) target = $region17
    $region16: #{tpu_custom_call.1} parent=1 // pred_region
      _
    $region17: #{tpu_custom_call.1} parent=1 // pred_fallthru
      _
    // Predicated region
    $region18: #{tpu_custom_call.1} parent=1 // pred_check
      _
    $region19: #{tpu_custom_call.1} parent=1 // pred_check_branch
      %31 = sbr.rel (0) target = $region21
    $region20: #{tpu_custom_call.1} parent=1 // pred_region
      _
    $region21: #{tpu_custom_call.1} parent=1 // pred_fallthru
      _
    // Predicated region
    $region22: #{tpu_custom_call.1} parent=1 // pred_check
      _
    $region23: #{tpu_custom_call.1} parent=1 // pred_check_branch
      %33 = sbr.rel (0) target = $region25
    $region24: #{tpu_custom_call.1} parent=1 // pred_region
      %34 = dma.done [#allocation3], 2048
    $region25: #{tpu_custom_call.1} parent=1 // pred_fallthru
      _
    %v35 = vld [vmem:[#allocation2] sm:$0xff]
    %v36 = vld [vmem:[#allocation2 + $0x8] sm:$0xff]
    %v37 = vld [vmem:[#allocation2 + $0x10] sm:$0xff]
    %v38 = vld [vmem:[#allocation2 + $0x18] sm:$0xff]
    %v39 = vld [vmem:[#allocation2 + $0x20] sm:$0xff]
    %v40 = vld [vmem:[#allocation2 + $0x28] sm:$0xff]
    %v41 = vld [vmem:[#allocation2 + $0x30] sm:$0xff]
    %v42 = vld [vmem:[#allocation2 + $0x38] sm:$0xff]
    %v43 = vld [vmem:[#allocation2 + $0x40] sm:$0xff]
    %v44 = vld [vmem:[#allocation2 + $0x48] sm:$0xff]
    %v45 = vld [vmem:[#allocation2 + $0x50] sm:$0xff]
    %v46 = vld [vmem:[#allocation2 + $0x58] sm:$0xff]
    %v47 = vld [vmem:[#allocation2 + $0x60] sm:$0xff]
    %v48 = vld [vmem:[#allocation2 + $0x68] sm:$0xff]
    %v49 = vld [vmem:[#allocation2 + $0x70] sm:$0xff]
    %v50 = vld [vmem:[#allocation2 + $0x78] sm:$0xff]
    %v51 = vld [vmem:[%s1] sm:$0xff]
    %v52 = vld [vmem:[%s1 + $0x8] sm:$0xff]
    %v53 = vld [vmem:[%s1 + $0x10] sm:$0xff]
    %v54 = vld [vmem:[%s1 + $0x18] sm:$0xff]
    %v55 = vld [vmem:[%s2] sm:$0x1]
    %v57 = vlaneseq
    %v58 = vshrl.u32 %v57, 7
    %v59 = vsub.s32 0, %v58
    %v60 = vrot.slane %v55, %v59
    %vm62 = vcmask 261120
    %v64 = vsel %vm62, %v35, 0
    %v67 = vsel %vm62, %v36, 0
    %v70 = vsel %vm62, %v37, 0
    %v73 = vsel %vm62, %v38, 0
    %v76 = vsel %vm62, %v39, 0
    %v79 = vsel %vm62, %v40, 0
    %v82 = vsel %vm62, %v41, 0
    %v85 = vsel %vm62, %v42, 0
    %v88 = vsel %vm62, %v43, 0
    %v91 = vsel %vm62, %v44, 0
    %v94 = vsel %vm62, %v45, 0
    %v97 = vsel %vm62, %v46, 0
    %v100 = vsel %vm62, %v47, 0
    %v103 = vsel %vm62, %v48, 0
    %v106 = vsel %vm62, %v49, 0
    %v109 = vsel %vm62, %v50, 0
    %111 = vmatprep.subr.mxu0 0.0
    %112 = vmatpush1.msra.mxu0 %v51
    %113 = vmatprep.subr.mxu0 0.0
    %114 = vmatpush1.msra.mxu0 %v52
    %115 = vmatprep.subr.mxu0 0.0
    %116 = vmatpush1.msra.mxu0 %v53
    %117 = vmatprep.subr.mxu0 0.0
    %118 = vmatpush1.msra.mxu0 %v54
    %119 = vmatprep.subr.mxu0 0.0
    %120 = vmatpush1.msra.mxu0 0.0
    %121 = vmatprep.subr.mxu0 0.0
    %122 = vmatpush1.msra.mxu0 0.0
    %123 = vmatprep.subr.mxu0 0.0
    %124 = vmatpush1.msra.mxu0 0.0
    %125 = vmatprep.subr.mxu0 0.0
    %126 = vmatpush1.msra.mxu0 0.0
    %127 = vmatprep.subr.mxu0 0.0
    %128 = vmatpush1.msra.mxu0 0.0
    %129 = vmatprep.subr.mxu0 0.0
    %130 = vmatpush1.msra.mxu0 0.0
    %131 = vmatprep.subr.mxu0 0.0
    %132 = vmatpush1.msra.mxu0 0.0
    %133 = vmatprep.subr.mxu0 0.0
    %134 = vmatpush1.msra.mxu0 0.0
    %135 = vmatprep.subr.mxu0 0.0
    %136 = vmatpush1.msra.mxu0 0.0
    %137 = vmatprep.subr.mxu0 0.0
    %138 = vmatpush1.msra.mxu0 0.0
    %139 = vmatprep.subr.mxu0 0.0
    %140 = vmatpush1.msra.mxu0 0.0
    %141 = vmatprep.subr.mxu0 0.0
    %142 = vmatpush1.msra.mxu0 0.0
    %143 = vmatprep.subr.mxu0 0.0
    %144 = vmatpush1.msra.mxu0 0.0
    %145 = vmatprep.subr.mxu0 0.0
    %146 = vmatpush1.msra.mxu0 0.0
    %147 = vmatprep.subr.mxu0 0.0
    %148 = vmatpush1.msra.mxu0 0.0
    %149 = vmatprep.subr.mxu0 0.0
    %150 = vmatpush1.msra.mxu0 0.0
    %151 = vmatprep.subr.mxu0 0.0
    %152 = vmatpush1.msra.mxu0 0.0
    %153 = vmatprep.subr.mxu0 0.0
    %154 = vmatpush1.msra.mxu0 0.0
    %155 = vmatprep.subr.mxu0 0.0
    %156 = vmatpush1.msra.mxu0 0.0
    %157 = vmatprep.subr.mxu0 0.0
    %158 = vmatpush1.msra.mxu0 0.0
    %159 = vmatprep.subr.mxu0 0.0
    %160 = vmatpush1.msra.mxu0 0.0
    %161 = vmatprep.subr.mxu0 0.0
    %162 = vmatpush1.msra.mxu0 0.0
    %163 = vmatprep.subr.mxu0 0.0
    %164 = vmatpush1.msra.mxu0 0.0
    %165 = vmatprep.subr.mxu0 0.0
    %166 = vmatpush1.msra.mxu0 0.0
    %167 = vmatprep.subr.mxu0 0.0
    %168 = vmatpush1.msra.mxu0 0.0
    %169 = vmatprep.subr.mxu0 0.0
    %170 = vmatpush1.msra.mxu0 0.0
    %171 = vmatprep.subr.mxu0 0.0
    %172 = vmatpush1.msra.mxu0 0.0
    %173 = vmatprep.subr.mxu0 0.0
    %174 = vmatpush1.msra.mxu0 0.0
    %175 = vmatprep.mubr.f32.mxu0 0.0
    %176 = vmatmul.mubr.f32.gmra.mrb[0].mxu0 %v64
    %v177 = vpop.f32.mrb[0].mxu0
    %v178 = vadd.f32 %v60, %v177
    %v179 = vpop.f32.mrb[0].mxu0
    %180 = vmatprep.mubr.f32.mxu0 0.0
    %181 = vmatmul.mubr.f32.gmra.mrb[0].mxu0 %v67
    %v182 = vpop.f32.mrb[0].mxu0
    %v183 = vadd.f32 %v60, %v182
    %v184 = vpop.f32.mrb[0].mxu0
    %185 = vmatprep.mubr.f32.mxu0 0.0
    %186 = vmatmul.mubr.f32.gmra.mrb[0].mxu0 %v70
    %v187 = vpop.f32.mrb[0].mxu0
    %v188 = vadd.f32 %v60, %v187
    %v189 = vpop.f32.mrb[0].mxu0
    %190 = vmatprep.mubr.f32.mxu0 0.0
    %191 = vmatmul.mubr.f32.gmra.mrb[0].mxu0 %v73
    %v192 = vpop.f32.mrb[0].mxu0
    %v193 = vadd.f32 %v60, %v192
    %v194 = vpop.f32.mrb[0].mxu0
    %195 = vmatprep.mubr.f32.mxu0 0.0
    %196 = vmatmul.mubr.f32.gmra.mrb[0].mxu0 %v76
    %v197 = vpop.f32.mrb[0].mxu0
    %v198 = vadd.f32 %v60, %v197
    %v199 = vpop.f32.mrb[0].mxu0
    %200 = vmatprep.mubr.f32.mxu0 0.0
    %201 = vmatmul.mubr.f32.gmra.mrb[0].mxu0 %v79
    %v202 = vpop.f32.mrb[0].mxu0
    %v203 = vadd.f32 %v60, %v202
    %v204 = vpop.f32.mrb[0].mxu0
    %205 = vmatprep.mubr.f32.mxu0 0.0
    %206 = vmatmul.mubr.f32.gmra.mrb[0].mxu0 %v82
    %v207 = vpop.f32.mrb[0].mxu0
    %v208 = vadd.f32 %v60, %v207
    %v209 = vpop.f32.mrb[0].mxu0
    %210 = vmatprep.mubr.f32.mxu0 0.0
    %211 = vmatmul.mubr.f32.gmra.mrb[0].mxu0 %v85
    %v212 = vpop.f32.mrb[0].mxu0
    %v213 = vadd.f32 %v60, %v212
    %v214 = vpop.f32.mrb[0].mxu0
    %215 = vmatprep.mubr.f32.mxu0 0.0
    %216 = vmatmul.mubr.f32.gmra.mrb[0].mxu0 %v88
    %v217 = vpop.f32.mrb[0].mxu0
    %v218 = vadd.f32 %v60, %v217
    %v219 = vpop.f32.mrb[0].mxu0
    %220 = vmatprep.mubr.f32.mxu0 0.0
    %221 = vmatmul.mubr.f32.gmra.mrb[0].mxu0 %v91
    %v222 = vpop.f32.mrb[0].mxu0
    %v223 = vadd.f32 %v60, %v222
    %v224 = vpop.f32.mrb[0].mxu0
    %225 = vmatprep.mubr.f32.mxu0 0.0
    %226 = vmatmul.mubr.f32.gmra.mrb[0].mxu0 %v94
    %v227 = vpop.f32.mrb[0].mxu0
    %v228 = vadd.f32 %v60, %v227
    %v229 = vpop.f32.mrb[0].mxu0
    %230 = vmatprep.mubr.f32.mxu0 0.0
    %231 = vmatmul.mubr.f32.gmra.mrb[0].mxu0 %v97
    %v232 = vpop.f32.mrb[0].mxu0
    %v233 = vadd.f32 %v60, %v232
    %v234 = vpop.f32.mrb[0].mxu0
    %235 = vmatprep.mubr.f32.mxu0 0.0
    %236 = vmatmul.mubr.f32.gmra.mrb[0].mxu0 %v100
    %v237 = vpop.f32.mrb[0].mxu0
    %v238 = vadd.f32 %v60, %v237
    %v239 = vpop.f32.mrb[0].mxu0
    %240 = vmatprep.mubr.f32.mxu0 0.0
    %241 = vmatmul.mubr.f32.gmra.mrb[0].mxu0 %v103
    %v242 = vpop.f32.mrb[0].mxu0
    %v243 = vadd.f32 %v60, %v242
    %v244 = vpop.f32.mrb[0].mxu0
    %245 = vmatprep.mubr.f32.mxu0 0.0
    %246 = vmatmul.mubr.f32.gmra.mrb[0].mxu0 %v106
    %v247 = vpop.f32.mrb[0].mxu0
    %v248 = vadd.f32 %v60, %v247
    %v249 = vpop.f32.mrb[0].mxu0
    %250 = vmatprep.mubr.f32.mxu0 0.0
    %251 = vmatmul.mubr.f32.gmra.mrb[0].mxu0 %v109
    %v252 = vpop.f32.mrb[0].mxu0
    %v253 = vadd.f32 %v60, %v252
    %v254 = vpop.f32.mrb[0].mxu0
    %255 = vdwg.mxu0
    %v256 = vtanh.pop %v178
    %v257 = vtanh.pop %v183
    %v258 = vtanh.pop %v188
    %v259 = vtanh.pop %v193
    %v260 = vtanh.pop %v198
    %v261 = vtanh.pop %v203
    %v262 = vtanh.pop %v208
    %v263 = vtanh.pop %v213
    %v264 = vtanh.pop %v218
    %v265 = vtanh.pop %v223
    %v266 = vtanh.pop %v228
    %v267 = vtanh.pop %v233
    %v268 = vtanh.pop %v238
    %v269 = vtanh.pop %v243
    %v270 = vtanh.pop %v248
    %v271 = vtanh.pop %v253
    %v272 = vld [vmem:[%s3] sm:$0xff]
    %v273 = vld [vmem:[%s3 + $0x8] sm:$0xff]
    %v274 = vld [vmem:[%s3 + $0x10] sm:$0xff]
    %v275 = vld [vmem:[%s3 + $0x18] sm:$0xff]
    %v276 = vld [vmem:[%s4] sm:$0x1]
    %v278 = vlaneseq
    %v279 = vshrl.u32 %v278, 7
    %v280 = vsub.s32 0, %v279
    %v281 = vrot.slane %v276, %v280
    %v284 = vsel %vm62, %v256, 0
    %v287 = vsel %vm62, %v257, 0
    %v290 = vsel %vm62, %v258, 0
    %v293 = vsel %vm62, %v259, 0
    %v296 = vsel %vm62, %v260, 0
    %v299 = vsel %vm62, %v261, 0
    %v302 = vsel %vm62, %v262, 0
    %v305 = vsel %vm62, %v263, 0
    %v308 = vsel %vm62, %v264, 0
    %v311 = vsel %vm62, %v265, 0
    %v314 = vsel %vm62, %v266, 0
    %v317 = vsel %vm62, %v267, 0
    %v320 = vsel %vm62, %v268, 0
    %v323 = vsel %vm62, %v269, 0
    %v326 = vsel %vm62, %v270, 0
    %v329 = vsel %vm62, %v271, 0
    %331 = vmatprep.subr.mxu0 0.0
    %332 = vmatpush1.msra.mxu0 %v272
    %333 = vmatprep.subr.mxu0 0.0
    %334 = vmatpush1.msra.mxu0 %v273
    %335 = vmatprep.subr.mxu0 0.0
    %336 = vmatpush1.msra.mxu0 %v274
    %337 = vmatprep.subr.mxu0 0.0
    %338 = vmatpush1.msra.mxu0 %v275
    %339 = vmatprep.subr.mxu0 0.0
    %340 = vmatpush1.msra.mxu0 0.0
    %341 = vmatprep.subr.mxu0 0.0
    %342 = vmatpush1.msra.mxu0 0.0
    %343 = vmatprep.subr.mxu0 0.0
    %344 = vmatpush1.msra.mxu0 0.0
    %345 = vmatprep.subr.mxu0 0.0
    %346 = vmatpush1.msra.mxu0 0.0
    %347 = vmatprep.subr.mxu0 0.0
    %348 = vmatpush1.msra.mxu0 0.0
    %349 = vmatprep.subr.mxu0 0.0
    %350 = vmatpush1.msra.mxu0 0.0
    %351 = vmatprep.subr.mxu0 0.0
    %352 = vmatpush1.msra.mxu0 0.0
    %353 = vmatprep.subr.mxu0 0.0
    %354 = vmatpush1.msra.mxu0 0.0
    %355 = vmatprep.subr.mxu0 0.0
    %356 = vmatpush1.msra.mxu0 0.0
    %357 = vmatprep.subr.mxu0 0.0
    %358 = vmatpush1.msra.mxu0 0.0
    %359 = vmatprep.subr.mxu0 0.0
    %360 = vmatpush1.msra.mxu0 0.0
    %361 = vmatprep.subr.mxu0 0.0
    %362 = vmatpush1.msra.mxu0 0.0
    %363 = vmatprep.subr.mxu0 0.0
    %364 = vmatpush1.msra.mxu0 0.0
    %365 = vmatprep.subr.mxu0 0.0
    %366 = vmatpush1.msra.mxu0 0.0
    %367 = vmatprep.subr.mxu0 0.0
    %368 = vmatpush1.msra.mxu0 0.0
    %369 = vmatprep.subr.mxu0 0.0
    %370 = vmatpush1.msra.mxu0 0.0
    %371 = vmatprep.subr.mxu0 0.0
    %372 = vmatpush1.msra.mxu0 0.0
    %373 = vmatprep.subr.mxu0 0.0
    %374 = vmatpush1.msra.mxu0 0.0
    %375 = vmatprep.subr.mxu0 0.0
    %376 = vmatpush1.msra.mxu0 0.0
    %377 = vmatprep.subr.mxu0 0.0
    %378 = vmatpush1.msra.mxu0 0.0
    %379 = vmatprep.subr.mxu0 0.0
    %380 = vmatpush1.msra.mxu0 0.0
    %381 = vmatprep.subr.mxu0 0.0
    %382 = vmatpush1.msra.mxu0 0.0
    %383 = vmatprep.subr.mxu0 0.0
    %384 = vmatpush1.msra.mxu0 0.0
    %385 = vmatprep.subr.mxu0 0.0
    %386 = vmatpush1.msra.mxu0 0.0
    %387 = vmatprep.subr.mxu0 0.0
    %388 = vmatpush1.msra.mxu0 0.0
    %389 = vmatprep.subr.mxu0 0.0
    %390 = vmatpush1.msra.mxu0 0.0
    %391 = vmatprep.subr.mxu0 0.0
    %392 = vmatpush1.msra.mxu0 0.0
    %393 = vmatprep.subr.mxu0 0.0
    %394 = vmatpush1.msra.mxu0 0.0
    %395 = vmatprep.mubr.f32.mxu0 0.0
    %396 = vmatmul.mubr.f32.gmra.mrb[0].mxu0 %v284
    %v397 = vpop.f32.mrb[0].mxu0
    %v398 = vadd.f32 %v281, %v397
    %v399 = vpop.f32.mrb[0].mxu0
    %400 = vmatprep.mubr.f32.mxu0 0.0
    %401 = vmatmul.mubr.f32.gmra.mrb[0].mxu0 %v287
    %v402 = vpop.f32.mrb[0].mxu0
    %v403 = vadd.f32 %v281, %v402
    %v404 = vpop.f32.mrb[0].mxu0
    %405 = vmatprep.mubr.f32.mxu0 0.0
    %406 = vmatmul.mubr.f32.gmra.mrb[0].mxu0 %v290
    %v407 = vpop.f32.mrb[0].mxu0
    %v408 = vadd.f32 %v281, %v407
    %v409 = vpop.f32.mrb[0].mxu0
    %410 = vmatprep.mubr.f32.mxu0 0.0
    %411 = vmatmul.mubr.f32.gmra.mrb[0].mxu0 %v293
    %v412 = vpop.f32.mrb[0].mxu0
    %v413 = vadd.f32 %v281, %v412
    %v414 = vpop.f32.mrb[0].mxu0
    %415 = vmatprep.mubr.f32.mxu0 0.0
    %416 = vmatmul.mubr.f32.gmra.mrb[0].mxu0 %v296
    %v417 = vpop.f32.mrb[0].mxu0
    %v418 = vadd.f32 %v281, %v417
    %v419 = vpop.f32.mrb[0].mxu0
    %420 = vmatprep.mubr.f32.mxu0 0.0
    %421 = vmatmul.mubr.f32.gmra.mrb[0].mxu0 %v299
    %v422 = vpop.f32.mrb[0].mxu0
    %v423 = vadd.f32 %v281, %v422
    %v424 = vpop.f32.mrb[0].mxu0
    %425 = vmatprep.mubr.f32.mxu0 0.0
    %426 = vmatmul.mubr.f32.gmra.mrb[0].mxu0 %v302
    %v427 = vpop.f32.mrb[0].mxu0
    %v428 = vadd.f32 %v281, %v427
    %v429 = vpop.f32.mrb[0].mxu0
    %430 = vmatprep.mubr.f32.mxu0 0.0
    %431 = vmatmul.mubr.f32.gmra.mrb[0].mxu0 %v305
    %v432 = vpop.f32.mrb[0].mxu0
    %v433 = vadd.f32 %v281, %v432
    %v434 = vpop.f32.mrb[0].mxu0
    %435 = vmatprep.mubr.f32.mxu0 0.0
    %436 = vmatmul.mubr.f32.gmra.mrb[0].mxu0 %v308
    %v437 = vpop.f32.mrb[0].mxu0
    %v438 = vadd.f32 %v281, %v437
    %v439 = vpop.f32.mrb[0].mxu0
    %440 = vmatprep.mubr.f32.mxu0 0.0
    %441 = vmatmul.mubr.f32.gmra.mrb[0].mxu0 %v311
    %v442 = vpop.f32.mrb[0].mxu0
    %v443 = vadd.f32 %v281, %v442
    %v444 = vpop.f32.mrb[0].mxu0
    %445 = vmatprep.mubr.f32.mxu0 0.0
    %446 = vmatmul.mubr.f32.gmra.mrb[0].mxu0 %v314
    %v447 = vpop.f32.mrb[0].mxu0
    %v448 = vadd.f32 %v281, %v447
    %v449 = vpop.f32.mrb[0].mxu0
    %450 = vmatprep.mubr.f32.mxu0 0.0
    %451 = vmatmul.mubr.f32.gmra.mrb[0].mxu0 %v317
    %v452 = vpop.f32.mrb[0].mxu0
    %v453 = vadd.f32 %v281, %v452
    %v454 = vpop.f32.mrb[0].mxu0
    %455 = vmatprep.mubr.f32.mxu0 0.0
    %456 = vmatmul.mubr.f32.gmra.mrb[0].mxu0 %v320
    %v457 = vpop.f32.mrb[0].mxu0
    %v458 = vadd.f32 %v281, %v457
    %v459 = vpop.f32.mrb[0].mxu0
    %460 = vmatprep.mubr.f32.mxu0 0.0
    %461 = vmatmul.mubr.f32.gmra.mrb[0].mxu0 %v323
    %v462 = vpop.f32.mrb[0].mxu0
    %v463 = vadd.f32 %v281, %v462
    %v464 = vpop.f32.mrb[0].mxu0
    %465 = vmatprep.mubr.f32.mxu0 0.0
    %466 = vmatmul.mubr.f32.gmra.mrb[0].mxu0 %v326
    %v467 = vpop.f32.mrb[0].mxu0
    %v468 = vadd.f32 %v281, %v467
    %v469 = vpop.f32.mrb[0].mxu0
    %470 = vmatprep.mubr.f32.mxu0 0.0
    %471 = vmatmul.mubr.f32.gmra.mrb[0].mxu0 %v329
    %v472 = vpop.f32.mrb[0].mxu0
    %v473 = vadd.f32 %v281, %v472
    %v474 = vpop.f32.mrb[0].mxu0
    %475 = vdwg.mxu0
    %vm476 = vcmask 31744
    %v477 = vsel %vm476, %v398, -inf
    %v478 = vsel %vm476, %v403, -inf
    %v479 = vmax.f32 %v477, %v478
    %v480 = vrot.slane %v479, 4
    %v481 = vmax.f32 %v479, %v480
    %v482 = vrot.slane %v481, 2
    %v483 = vmax.f32 %v481, %v482
    %v484 = vrot.slane %v483, 1
    %v485 = vmax.f32 %v483, %v484
    %v486 = vsel %vm476, %v408, -inf
    %v487 = vsel %vm476, %v413, -inf
    %v488 = vmax.f32 %v486, %v487
    %v489 = vrot.slane %v488, 4
    %v490 = vmax.f32 %v488, %v489
    %v491 = vrot.slane %v490, 2
    %v492 = vmax.f32 %v490, %v491
    %v493 = vrot.slane %v492, 1
    %v494 = vmax.f32 %v492, %v493
    %v495 = vsel %vm476, %v418, -inf
    %v496 = vsel %vm476, %v423, -inf
    %v497 = vmax.f32 %v495, %v496
    %v498 = vrot.slane %v497, 4
    %v499 = vmax.f32 %v497, %v498
    %v500 = vrot.slane %v499, 2
    %v501 = vmax.f32 %v499, %v500
    %v502 = vrot.slane %v501, 1
    %v503 = vmax.f32 %v501, %v502
    %v504 = vsel %vm476, %v428, -inf
    %v505 = vsel %vm476, %v433, -inf
    %v506 = vmax.f32 %v504, %v505
    %v507 = vrot.slane %v506, 4
    %v508 = vmax.f32 %v506, %v507
    %v509 = vrot.slane %v508, 2
    %v510 = vmax.f32 %v508, %v509
    %v511 = vrot.slane %v510, 1
    %v512 = vmax.f32 %v510, %v511
    %v513 = vsel %vm476, %v438, -inf
    %v514 = vsel %vm476, %v443, -inf
    %v515 = vmax.f32 %v513, %v514
    %v516 = vrot.slane %v515, 4
    %v517 = vmax.f32 %v515, %v516
    %v518 = vrot.slane %v517, 2
    %v519 = vmax.f32 %v517, %v518
    %v520 = vrot.slane %v519, 1
    %v521 = vmax.f32 %v519, %v520
    %v522 = vsel %vm476, %v448, -inf
    %v523 = vsel %vm476, %v453, -inf
    %v524 = vmax.f32 %v522, %v523
    %v525 = vrot.slane %v524, 4
    %v526 = vmax.f32 %v524, %v525
    %v527 = vrot.slane %v526, 2
    %v528 = vmax.f32 %v526, %v527
    %v529 = vrot.slane %v528, 1
    %v530 = vmax.f32 %v528, %v529
    %v531 = vsel %vm476, %v458, -inf
    %v532 = vsel %vm476, %v463, -inf
    %v533 = vmax.f32 %v531, %v532
    %v534 = vrot.slane %v533, 4
    %v535 = vmax.f32 %v533, %v534
    %v536 = vrot.slane %v535, 2
    %v537 = vmax.f32 %v535, %v536
    %v538 = vrot.slane %v537, 1
    %v539 = vmax.f32 %v537, %v538
    %v540 = vsel %vm476, %v468, -inf
    %v541 = vsel %vm476, %v473, -inf
    %v542 = vmax.f32 %v540, %v541
    %v543 = vrot.slane %v542, 4
    %v544 = vmax.f32 %v542, %v543
    %v545 = vrot.slane %v544, 2
    %v546 = vmax.f32 %v544, %v545
    %v547 = vrot.slane %v546, 1
    %v548 = vmax.f32 %v546, %v547
    %v549 = vsub.f32 %v398, %v485
    %v550 = vsub.f32 %v403, %v485
    %v551 = vsub.f32 %v408, %v494
    %v552 = vsub.f32 %v413, %v494
    %v553 = vsub.f32 %v418, %v503
    %v554 = vsub.f32 %v423, %v503
    %v555 = vsub.f32 %v428, %v512
    %v556 = vsub.f32 %v433, %v512
    %v557 = vsub.f32 %v438, %v521
    %v558 = vsub.f32 %v443, %v521
    %v559 = vsub.f32 %v448, %v530
    %v560 = vsub.f32 %v453, %v530
    %v561 = vsub.f32 %v458, %v539
    %v562 = vsub.f32 %v463, %v539
    %v563 = vsub.f32 %v468, %v548
    %v564 = vsub.f32 %v473, %v548
    %v565 = vmul.f32 %v549, 1.442695
    %v566 = vpow.pop %v565
    %v567 = vmul.f32 %v550, 1.442695
    %v568 = vpow.pop %v567
    %v569 = vmul.f32 %v551, 1.442695
    %v570 = vpow.pop %v569
    %v571 = vmul.f32 %v552, 1.442695
    %v572 = vpow.pop %v571
    %v573 = vmul.f32 %v553, 1.442695
    %v574 = vpow.pop %v573
    %v575 = vmul.f32 %v554, 1.442695
    %v576 = vpow.pop %v575
    %v577 = vmul.f32 %v555, 1.442695
    %v578 = vpow.pop %v577
    %v579 = vmul.f32 %v556, 1.442695
    %v580 = vpow.pop %v579
    %v581 = vmul.f32 %v557, 1.442695
    %v582 = vpow.pop %v581
    %v583 = vmul.f32 %v558, 1.442695
    %v584 = vpow.pop %v583
    %v585 = vmul.f32 %v559, 1.442695
    %v586 = vpow.pop %v585
    %v587 = vmul.f32 %v560, 1.442695
    %v588 = vpow.pop %v587
    %v589 = vmul.f32 %v561, 1.442695
    %v590 = vpow.pop %v589
    %v591 = vmul.f32 %v562, 1.442695
    %v592 = vpow.pop %v591
    %v593 = vmul.f32 %v563, 1.442695
    %v594 = vpow.pop %v593
    %v595 = vmul.f32 %v564, 1.442695
    %v596 = vpow.pop %v595
    %v597 = vsel %vm476, %v566, 0.0
    %v598 = vsel %vm476, %v568, 0.0
    %v599 = vadd.f32 %v597, %v598
    %v600 = vrot.slane %v599, 4
    %v601 = vadd.f32 %v599, %v600
    %v602 = vrot.slane %v601, 2
    %v603 = vadd.f32 %v601, %v602
    %v604 = vrot.slane %v603, 1
    %v605 = vadd.f32 %v603, %v604
    %v606 = vsel %vm476, %v570, 0.0
    %v607 = vsel %vm476, %v572, 0.0
    %v608 = vadd.f32 %v606, %v607
    %v609 = vrot.slane %v608, 4
    %v610 = vadd.f32 %v608, %v609
    %v611 = vrot.slane %v610, 2
    %v612 = vadd.f32 %v610, %v611
    %v613 = vrot.slane %v612, 1
    %v614 = vadd.f32 %v612, %v613
    %v615 = vsel %vm476, %v574, 0.0
    %v616 = vsel %vm476, %v576, 0.0
    %v617 = vadd.f32 %v615, %v616
    %v618 = vrot.slane %v617, 4
    %v619 = vadd.f32 %v617, %v618
    %v620 = vrot.slane %v619, 2
    %v621 = vadd.f32 %v619, %v620
    %v622 = vrot.slane %v621, 1
    %v623 = vadd.f32 %v621, %v622
    %v624 = vsel %vm476, %v578, 0.0
    %v625 = vsel %vm476, %v580, 0.0
    %v626 = vadd.f32 %v624, %v625
    %v627 = vrot.slane %v626, 4
    %v628 = vadd.f32 %v626, %v627
    %v629 = vrot.slane %v628, 2
    %v630 = vadd.f32 %v628, %v629
    %v631 = vrot.slane %v630, 1
    %v632 = vadd.f32 %v630, %v631
    %v633 = vsel %vm476, %v582, 0.0
    %v634 = vsel %vm476, %v584, 0.0
    %v635 = vadd.f32 %v633, %v634
    %v636 = vrot.slane %v635, 4
    %v637 = vadd.f32 %v635, %v636
    %v638 = vrot.slane %v637, 2
    %v639 = vadd.f32 %v637, %v638
    %v640 = vrot.slane %v639, 1
    %v641 = vadd.f32 %v639, %v640
    %v642 = vsel %vm476, %v586, 0.0
    %v643 = vsel %vm476, %v588, 0.0
    %v644 = vadd.f32 %v642, %v643
    %v645 = vrot.slane %v644, 4
    %v646 = vadd.f32 %v644, %v645
    %v647 = vrot.slane %v646, 2
    %v648 = vadd.f32 %v646, %v647
    %v649 = vrot.slane %v648, 1
    %v650 = vadd.f32 %v648, %v649
    %v651 = vsel %vm476, %v590, 0.0
    %v652 = vsel %vm476, %v592, 0.0
    %v653 = vadd.f32 %v651, %v652
    %v654 = vrot.slane %v653, 4
    %v655 = vadd.f32 %v653, %v654
    %v656 = vrot.slane %v655, 2
    %v657 = vadd.f32 %v655, %v656
    %v658 = vrot.slane %v657, 1
    %v659 = vadd.f32 %v657, %v658
    %v660 = vsel %vm476, %v594, 0.0
    %v661 = vsel %vm476, %v596, 0.0
    %v662 = vadd.f32 %v660, %v661
    %v663 = vrot.slane %v662, 4
    %v664 = vadd.f32 %v662, %v663
    %v665 = vrot.slane %v664, 2
    %v666 = vadd.f32 %v664, %v665
    %v667 = vrot.slane %v666, 1
    %v668 = vadd.f32 %v666, %v667
    %v669 = vrcp.pop %v605
    %v670 = vrcp.pop %v614
    %v671 = vrcp.pop %v623
    %v672 = vrcp.pop %v632
    %v673 = vrcp.pop %v641
    %v674 = vrcp.pop %v650
    %v675 = vrcp.pop %v659
    %v676 = vrcp.pop %v668
    %v677 = vmul.f32 %v566, %v669
    %v678 = vmul.f32 %v568, %v669
    %v679 = vmul.f32 %v570, %v670
    %v680 = vmul.f32 %v572, %v670
    %v681 = vmul.f32 %v574, %v671
    %v682 = vmul.f32 %v576, %v671
    %v683 = vmul.f32 %v578, %v672
    %v684 = vmul.f32 %v580, %v672
    %v685 = vmul.f32 %v582, %v673
    %v686 = vmul.f32 %v584, %v673
    %v687 = vmul.f32 %v586, %v674
    %v688 = vmul.f32 %v588, %v674
    %v689 = vmul.f32 %v590, %v675
    %v690 = vmul.f32 %v592, %v675
    %v691 = vmul.f32 %v594, %v676
    %v692 = vmul.f32 %v596, %v676
    %v693 = vsel %vm476, %v677, 0.0
    %694 = vadd.xlane.f32.xlu0 %v693
    %v695 = vpop.xlane.xlu0 %694
    %v696 = vsel %vm476, %v678, 0.0
    %697 = vadd.xlane.f32.xlu0 %v696
    %v698 = vpop.xlane.xlu0 %697
    %v699 = vsel %vm476, %v679, 0.0
    %700 = vadd.xlane.f32.xlu0 %v699
    %v701 = vpop.xlane.xlu0 %700
    %v702 = vsel %vm476, %v680, 0.0
    %703 = vadd.xlane.f32.xlu0 %v702
    %v704 = vpop.xlane.xlu0 %703
    %v705 = vsel %vm476, %v681, 0.0
    %706 = vadd.xlane.f32.xlu0 %v705
    %v707 = vpop.xlane.xlu0 %706
    %v708 = vsel %vm476, %v682, 0.0
    %709 = vadd.xlane.f32.xlu0 %v708
    %v710 = vpop.xlane.xlu0 %709
    %v711 = vsel %vm476, %v683, 0.0
    %712 = vadd.xlane.f32.xlu0 %v711
    %v713 = vpop.xlane.xlu0 %712
    %v714 = vsel %vm476, %v684, 0.0
    %715 = vadd.xlane.f32.xlu0 %v714
    %v716 = vpop.xlane.xlu0 %715
    %v717 = vsel %vm476, %v685, 0.0
    %718 = vadd.xlane.f32.xlu0 %v717
    %v719 = vpop.xlane.xlu0 %718
    %v720 = vsel %vm476, %v686, 0.0
    %721 = vadd.xlane.f32.xlu0 %v720
    %v722 = vpop.xlane.xlu0 %721
    %v723 = vsel %vm476, %v687, 0.0
    %724 = vadd.xlane.f32.xlu0 %v723
    %v725 = vpop.xlane.xlu0 %724
    %v726 = vsel %vm476, %v688, 0.0
    %727 = vadd.xlane.f32.xlu0 %v726
    %v728 = vpop.xlane.xlu0 %727
    %v729 = vsel %vm476, %v689, 0.0
    %730 = vadd.xlane.f32.xlu0 %v729
    %v731 = vpop.xlane.xlu0 %730
    %v732 = vsel %vm476, %v690, 0.0
    %733 = vadd.xlane.f32.xlu0 %v732
    %v734 = vpop.xlane.xlu0 %733
    %v735 = vsel %vm476, %v691, 0.0
    %736 = vadd.xlane.f32.xlu0 %v735
    %v737 = vpop.xlane.xlu0 %736
    %v738 = vsel %vm476, %v692, 0.0
    %739 = vadd.xlane.f32.xlu0 %v738
    %v740 = vpop.xlane.xlu0 %739
    %v741 = vmul.f32 %v695, 0.25
    %v742 = vmul.f32 %v698, 0.25
    %v743 = vmul.f32 %v701, 0.25
    %v744 = vmul.f32 %v704, 0.25
    %v745 = vmul.f32 %v707, 0.25
    %v746 = vmul.f32 %v710, 0.25
    %v747 = vmul.f32 %v713, 0.25
    %v748 = vmul.f32 %v716, 0.25
    %v749 = vmul.f32 %v719, 0.25
    %v750 = vmul.f32 %v722, 0.25
    %v751 = vmul.f32 %v725, 0.25
    %v752 = vmul.f32 %v728, 0.25
    %v753 = vmul.f32 %v731, 0.25
    %v754 = vmul.f32 %v734, 0.25
    %v755 = vmul.f32 %v737, 0.25
    %v756 = vmul.f32 %v740, 0.25
    %v757 = vmul.f32 %v741, %v35
    %v758 = vmul.f32 %v742, %v36
    %v759 = vmul.f32 %v743, %v37
    %v760 = vmul.f32 %v744, %v38
    %v761 = vmul.f32 %v745, %v39
    %v762 = vmul.f32 %v746, %v40
    %v763 = vmul.f32 %v747, %v41
    %v764 = vmul.f32 %v748, %v42
    %v765 = vmul.f32 %v749, %v43
    %v766 = vmul.f32 %v750, %v44
    %v767 = vmul.f32 %v751, %v45
    %v768 = vmul.f32 %v752, %v46
    %v769 = vmul.f32 %v753, %v47
    %v770 = vmul.f32 %v754, %v48
    %v771 = vmul.f32 %v755, %v49
    %v772 = vmul.f32 %v756, %v50
    %v773 = vsel %vm62, %v757, 0.0
    %v774 = vsel %vm62, %v758, 0.0
    %v775 = vadd.f32 %v773, %v774
    %v776 = vrot.slane %v775, 4
    %v777 = vadd.f32 %v775, %v776
    %v778 = vrot.slane %v777, 2
    %v779 = vadd.f32 %v777, %v778
    %v780 = vrot.slane %v779, 1
    %v781 = vadd.f32 %v779, %v780
    %v782 = vsel %vm62, %v759, 0.0
    %v783 = vsel %vm62, %v760, 0.0
    %v784 = vadd.f32 %v782, %v783
    %v785 = vrot.slane %v784, 4
    %v786 = vadd.f32 %v784, %v785
    %v787 = vrot.slane %v786, 2
    %v788 = vadd.f32 %v786, %v787
    %v789 = vrot.slane %v788, 1
    %v790 = vadd.f32 %v788, %v789
    %v791 = vsel %vm62, %v761, 0.0
    %v792 = vsel %vm62, %v762, 0.0
    %v793 = vadd.f32 %v791, %v792
    %v794 = vrot.slane %v793, 4
    %v795 = vadd.f32 %v793, %v794
    %v796 = vrot.slane %v795, 2
    %v797 = vadd.f32 %v795, %v796
    %v798 = vrot.slane %v797, 1
    %v799 = vadd.f32 %v797, %v798
    %v800 = vsel %vm62, %v763, 0.0
    %v801 = vsel %vm62, %v764, 0.0
    %v802 = vadd.f32 %v800, %v801
    %v803 = vrot.slane %v802, 4
    %v804 = vadd.f32 %v802, %v803
    %v805 = vrot.slane %v804, 2
    %v806 = vadd.f32 %v804, %v805
    %v807 = vrot.slane %v806, 1
    %v808 = vadd.f32 %v806, %v807
    %v809 = vsel %vm62, %v765, 0.0
    %v810 = vsel %vm62, %v766, 0.0
    %v811 = vadd.f32 %v809, %v810
    %v812 = vrot.slane %v811, 4
    %v813 = vadd.f32 %v811, %v812
    %v814 = vrot.slane %v813, 2
    %v815 = vadd.f32 %v813, %v814
    %v816 = vrot.slane %v815, 1
    %v817 = vadd.f32 %v815, %v816
    %v818 = vsel %vm62, %v767, 0.0
    %v819 = vsel %vm62, %v768, 0.0
    %v820 = vadd.f32 %v818, %v819
    %v821 = vrot.slane %v820, 4
    %v822 = vadd.f32 %v820, %v821
    %v823 = vrot.slane %v822, 2
    %v824 = vadd.f32 %v822, %v823
    %v825 = vrot.slane %v824, 1
    %v826 = vadd.f32 %v824, %v825
    %v827 = vsel %vm62, %v769, 0.0
    %v828 = vsel %vm62, %v770, 0.0
    %v829 = vadd.f32 %v827, %v828
    %v830 = vrot.slane %v829, 4
    %v831 = vadd.f32 %v829, %v830
    %v832 = vrot.slane %v831, 2
    %v833 = vadd.f32 %v831, %v832
    %v834 = vrot.slane %v833, 1
    %v835 = vadd.f32 %v833, %v834
    %v836 = vsel %vm62, %v771, 0.0
    %v837 = vsel %vm62, %v772, 0.0
    %v838 = vadd.f32 %v836, %v837
    %v839 = vrot.slane %v838, 4
    %v840 = vadd.f32 %v838, %v839
    %v841 = vrot.slane %v840, 2
    %v842 = vadd.f32 %v840, %v841
    %v843 = vrot.slane %v842, 1
    %v844 = vadd.f32 %v842, %v843
    %vm853 = vcmask 1041409
    %v854 = vsel %vm853, %v790, %v781
    %vm855 = vcmask 1042434
    %v856 = vsel %vm855, %v799, %v854
    %vm857 = vcmask 1043459
    %v858 = vsel %vm857, %v808, %v856
    %vm859 = vcmask 1044484
    %v860 = vsel %vm859, %v817, %v858
    %vm861 = vcmask 1045509
    %v862 = vsel %vm861, %v826, %v860
    %vm863 = vcmask 1046534
    %v864 = vsel %vm863, %v835, %v862
    %vm865 = vcmask 1047559
    %v866 = vsel %vm865, %v844, %v864
    %868 = vst.msk [vmem:[#allocation5] sm:$0xff] %vm62, %v866
    // Predicated region
    $region26: #{tpu_custom_call.1} parent=1 // pred_check
      _
    $region27: #{tpu_custom_call.1} parent=1 // pred_check_branch
      %870 = sbr.rel (0) target = $region29
    $region28: #{tpu_custom_call.1} parent=1 // pred_region
      %s872 = ssub.s32 128, 128
      %873 = vsyncadd [#allocation4], %s872
      %s875 = sshll.u32 [#allocation5], 4
      %s876 = int_to_ptr.vmem [resolvable:$true] %s875
      %878 = dma.vmem_to_hbm [thread:$0]  %s876, 128, %s5, [#allocation4]
    $region29: #{tpu_custom_call.1} parent=1 // pred_fallthru
      _
    // Predicated region
    $region30: #{tpu_custom_call.1} parent=1 // pred_check
      _
    $region31: #{tpu_custom_call.1} parent=1 // pred_check_branch
      %880 = sbr.rel (0) target = $region33
    $region32: #{tpu_custom_call.1} parent=1 // pred_region
      %881 = dma.done [#allocation4], 128
    $region33: #{tpu_custom_call.1} parent=1 // pred_fallthru
      _
    %882 = vsyncpa [#allocation3], 1
    %883 = vsyncpa [#allocation4], 1

</llo_original>
